<compile_context>
chip_gen: v7x
topology: tpu7x:2x2x1
jax: 0.10.0
libtpu: 0.0.40
codegen_flags: <defaults>
</compile_context>

<pallas_src>
import functools
import math

import jax
import jax.numpy as jnp
from jax.experimental import pallas as pl
from jax.experimental.pallas import tpu as pltpu


def _round_up(x, m):
    return (x + m - 1) // m * m


def _choose_tv(V, tv_max):
    """Vocab tile: multiple of 128, <= tv_max, with <=~12.5% pad waste."""
    tv = min(tv_max, _round_up(V, 128))
    while tv > 128 and _round_up(V, tv) - V > max(V // 8, 128):
        tv = max(128, _round_up(tv // 2, 128))
    return tv


def _choose_tm(M, tm_max):
    """M tile: multiple of 8, <= tm_max.  For non-tiny M keep >= 2 tiles so the
    'parallel' M axis splits across v7x's two TensorCores, and cap pad waste."""
    Mr = _round_up(M, 8)
    tm = min(tm_max, Mr)
    if Mr >= 512:
        while tm > 256 and (pl.cdiv(Mr, tm) < 2 or _round_up(Mr, tm) - Mr > Mr // 8):
            tm = max(256, _round_up(tm // 2, 8))
    return tm


def _block_spec(shape, index_map, buffers=None):
    """BlockSpec, optionally with an explicit pipeline buffer count.  Falls back to a
    plain BlockSpec if pipeline_mode / pl.Buffered is unavailable in the running JAX."""
    if buffers is not None:
        try:
            return pl.BlockSpec(shape, index_map, pipeline_mode=pl.Buffered(buffers))
        except (AttributeError, TypeError):
            pass
    return pl.BlockSpec(shape, index_map)


def _vmem_bytes_estimate(tm, tv, H, out_bytes):
    # Conservative: assume every block is double-buffered (even the ones we request
    # Buffered(1) for, in case the request is ignored).
    return (2 * (tm * H * 2 + H * H * 2 + 3 * H * 4)            # x, dense W, b1/g/b
            + 2 * (H * tv * 2 + tv * 4 + tm * tv * out_bytes)   # decoder W/b, out tile
            + tm * H * 2)                                       # cached transform


def prepare_params(params, *, tv=1024):
    """One-time parameter prep: cast weights to their streaming dtypes and pad the
    vocab axis, so the per-call hot path does no jnp.pad/astype of the decoder weight."""
    w2 = params["decoder_w"]
    H, V = w2.shape
    Vp = _round_up(V, _choose_tv(V, tv))
    w2 = w2.astype(jnp.bfloat16)
    b2 = params["decoder_b"].astype(jnp.float32)
    if Vp != V:
        w2 = jnp.pad(w2, ((0, 0), (0, Vp - V)))
        b2 = jnp.pad(b2, ((0, Vp - V),))
    return {
        "dense_w": params["dense_w"].astype(jnp.bfloat16),               # (H, H)
        "dense_b": params["dense_b"].astype(jnp.float32).reshape(1, H),
        "ln_gamma": params["ln_gamma"].astype(jnp.float32).reshape(1, H),
        "ln_beta": params["ln_beta"].astype(jnp.float32).reshape(1, H),
        "decoder_w": w2,                                                  # (H, Vp) bf16
        "decoder_b": b2.reshape(1, Vp),
        "vocab_size": V,
        "padded_vocab": Vp,
    }


def _head_kernel(x_ref, w1_ref, b1_ref, gamma_ref, beta_ref, w2_ref, b2_ref,
                 out_ref, t_scratch, *, eps):
    """Fused prediction head.

    Grid = (M_tiles, V_tiles).  The transform (dense + exact GELU + LayerNorm) for the
    current M tile is computed once (vocab-tile index j == 0) and cached in VMEM scratch
    (bf16); every vocab tile then does a (tm, H) @ (H, tv) bf16 MXU matmul with f32
    accumulation + bias.

    NOTE: the scratch caching is only valid because the vocab axis (j) is the innermost
    grid axis with "arbitrary" (sequential) semantics; do NOT mark it "parallel".
    """
    @pl.when(pl.program_id(1) == 0)
    def _():
        # dense: bf16 x bf16 -> f32 accumulation on the MXU
        h = jnp.dot(x_ref[...], w1_ref[...],
                    preferred_element_type=jnp.float32) + b1_ref[...]
        # exact (erf-based) GELU, matching torch.nn.GELU / ACT2FN["gelu"]
        h = 0.5 * h * (1.0 + jax.lax.erf(h * (1.0 / math.sqrt(2.0))))
        # LayerNorm over the hidden (last) axis, in f32
        mu = jnp.mean(h, axis=-1, keepdims=True)
        var = jnp.mean(jnp.square(h - mu), axis=-1, keepdims=True)
        h = (h - mu) * jax.lax.rsqrt(var + eps)
        h = h * gamma_ref[...] + beta_ref[...]
        t_scratch[...] = h.astype(t_scratch.dtype)

    # decoder GEMM: bf16 x bf16 -> f32 accumulate on the MXU, then bias
    logits = jnp.dot(t_scratch[...], w2_ref[...],
                     preferred_element_type=jnp.float32) + b2_ref[...]
    out_ref[...] = logits.astype(out_ref.dtype)


def bert_lm_prediction_head(hidden_states, params, *, eps=1e-12, tm=2048, tv=1024,
                            out_dtype=jnp.bfloat16):
    """hidden_states: (B, S, H).  Returns logits (B, S, V) in out_dtype (bf16 default).

    `params` may be either raw (init_params-style) or the output of prepare_params();
    for repeated calls, prepare once to keep weight casting/padding off the hot path.
    """
    B, S, H = hidden_states.shape
    if "padded_vocab" not in params:
        params = prepare_params(params, tv=tv)
    V = params["vocab_size"]
    Vp = params["padded_vocab"]
    w1, b1 = params["dense_w"], params["dense_b"]
    gamma, beta = params["ln_gamma"], params["ln_beta"]
    w2, b2 = params["decoder_w"], params["decoder_b"]

    M = B * S
    x = hidden_states.reshape(M, H)
    if x.dtype != jnp.bfloat16:
        x = x.astype(jnp.bfloat16)   # bf16 stream; LayerNorm re-normalizes, loss is tiny

    out_bytes = jnp.dtype(out_dtype).itemsize

    # Per-chip VMEM budget (v5e/v6e: 128 MiB, v7x: 64 MiB per TensorCore); leave ~15%
    # headroom for compiler-internal scratch.
    try:
        vmem_cap = int(pltpu.get_tpu_info().vmem_capacity_bytes)
    except Exception:
        vmem_cap = 64 * 1024 * 1024
    vmem_limit = max(32 * 1024 * 1024, int(vmem_cap * 0.85))

    # Tile selection: as large as fits (fewer decoder-weight re-streams, fewer grid
    # steps), clamped for small shapes / pad waste / megacore evenness / VMEM budget.
    tm = _choose_tm(M, tm)
    tv = _choose_tv(V, tv)
    while _vmem_bytes_estimate(tm, tv, H, out_bytes) > vmem_limit and tm > 256:
        tm = max(256, _round_up(tm // 2, 8))
    while _vmem_bytes_estimate(tm, tv, H, out_bytes) > vmem_limit and tv > 128:
        tv = max(128, _round_up(tv // 2, 128))
    tv = min(tv, Vp)
    if Vp % tv:   # pre-padded vocab extent must stay divisible by the vocab tile
        tv = max(d for d in range(128, tv + 1, 128) if Vp % d == 0)

    Mp = _round_up(M, tm)
    if Mp != M:
        x = jnp.pad(x, ((0, Mp - M), (0, 0)))

    grid = (Mp // tm, Vp // tv)
    kernel = functools.partial(_head_kernel, eps=eps)

    cost = pl.CostEstimate(
        flops=2 * M * H * (H + V),
        transcendentals=M * H,
        bytes_accessed=(Mp * H * 2 + H * H * 2
                        + grid[0] * H * Vp * 2        # decoder-weight re-streams
                        + Mp * Vp * out_bytes),
    )

    out = pl.pallas_call(
        kernel,
        out_shape=jax.ShapeDtypeStruct((Mp, Vp), out_dtype),
        grid_spec=pltpu.PrefetchScalarGridSpec(
            num_scalar_prefetch=0,
            grid=grid,
            in_specs=[
                # x tile: block index changes only with i -> single pipeline buffer
                _block_spec((tm, H), lambda i, j: (i, 0), buffers=1),
                # constants: fetched once; single buffer reclaims VMEM (v7x)
                _block_spec((H, H), lambda i, j: (0, 0), buffers=1),   # dense W (bf16)
                _block_spec((1, H), lambda i, j: (0, 0), buffers=1),   # dense b
                _block_spec((1, H), lambda i, j: (0, 0), buffers=1),   # LN gamma
                _block_spec((1, H), lambda i, j: (0, 0), buffers=1),   # LN beta
                # streaming decoder weight / bias tiles: default double-buffering
                pl.BlockSpec((H, tv), lambda i, j: (0, j)),            # decoder W (bf16)
                pl.BlockSpec((1, tv), lambda i, j: (0, j)),            # decoder bias
            ],
            out_specs=pl.BlockSpec((tm, tv), lambda i, j: (i, j)),
            scratch_shapes=[pltpu.VMEM((tm, H), jnp.bfloat16)],        # cached transform
        ),
        compiler_params=pltpu.CompilerParams(
            # M axis "parallel" (megacore on v7x).  The vocab axis MUST stay
            # "arbitrary" (innermost, sequential) or the scratch caching is invalid.
            dimension_semantics=("parallel", "arbitrary"),
            vmem_limit_bytes=vmem_limit,
        ),
        cost_estimate=cost,
    )(x, w1, b1, gamma, beta, w2, b2)

    return out[:M, :V].reshape(B, S, V)


def init_params(key, hidden_size, vocab_size):
    k1, k2 = jax.random.split(key, 2)
    return {
        "dense_w": jax.random.normal(k1, (hidden_size, hidden_size), jnp.float32) * 0.02,
        "dense_b": jnp.zeros((hidden_size,), jnp.float32),
        "ln_gamma": jnp.ones((hidden_size,), jnp.float32),
        "ln_beta": jnp.zeros((hidden_size,), jnp.float32),
        "decoder_w": jax.random.normal(k2, (hidden_size, vocab_size), jnp.float32) * 0.02,
        "decoder_b": jnp.zeros((vocab_size,), jnp.float32),
    }


def _reference(hidden_states, params, eps=1e-12):
    h = hidden_states @ params["dense_w"] + params["dense_b"]
    h = jax.nn.gelu(h, approximate=False)
    mu = jnp.mean(h, axis=-1, keepdims=True)
    var = jnp.mean(jnp.square(h - mu), axis=-1, keepdims=True)
    h = (h - mu) * jax.lax.rsqrt(var + eps)
    h = h * params["ln_gamma"] + params["ln_beta"]
    return h @ params["decoder_w"] + params["decoder_b"]


if __name__ == "__main__":
    # Small shapes; V deliberately not a multiple of 128 to exercise vocab padding.
    B, S, H, V = 2, 8, 32, 300
    key = jax.random.PRNGKey(0)
    kx, kp = jax.random.split(key)
    hidden_states = jax.random.normal(kx, (B, S, H), jnp.float32)
    raw_params = init_params(kp, H, V)

    params = prepare_params(raw_params)   # one-time cast/pad (hoisted off the hot path)
    logits = bert_lm_prediction_head(hidden_states, params)
    jax.block_until_ready(logits)

    ref = _reference(hidden_states, raw_params)
    assert logits.shape == (B, S, V)
    assert logits.dtype == jnp.bfloat16
    # bf16 streams (x, weights, logits) with f32 MXU accumulation -> loose tolerance
    # vs the f32 reference.
    assert jnp.allclose(logits.astype(jnp.float32), ref, atol=3e-2, rtol=3e-2), \
        "mismatch vs reference"
    print("KERNEL_OK")
</pallas_src>

<mosaic_0001>
module attributes {stable_mosaic.version = 11 : i64} {
  func.func @_head_kernel(%arg0: i32, %arg1: i32, %arg2: memref<16x32xbf16, #tpu.memory_space<vmem>>, %arg3: memref<32x32xbf16, #tpu.memory_space<vmem>>, %arg4: memref<1x32xf32, #tpu.memory_space<vmem>>, %arg5: memref<1x32xf32, #tpu.memory_space<vmem>>, %arg6: memref<1x32xf32, #tpu.memory_space<vmem>>, %arg7: memref<32x384xbf16, #tpu.memory_space<vmem>>, %arg8: memref<1x384xf32, #tpu.memory_space<vmem>>, %arg9: memref<16x384xbf16, #tpu.memory_space<vmem>>, %arg10: memref<16x32xbf16, #tpu.memory_space<vmem>>) attributes {dimension_semantics = [#tpu.dimension_semantics<parallel>, #tpu.dimension_semantics<arbitrary>], iteration_bounds = array<i64: 1, 1>, scalar_prefetch = 0 : i64, scratch_operands = 1 : i64, tpu.core_type = #tpu.core_type<tc>, window_params = [{pipeline_mode = #tpu.pipeline_mode<synchronous>, transform_indices = @transform_0, window_bounds = array<i64: 16, 32>}, {pipeline_mode = #tpu.pipeline_mode<synchronous>, transform_indices = @transform_1, window_bounds = array<i64: 32, 32>}, {pipeline_mode = #tpu.pipeline_mode<synchronous>, transform_indices = @transform_2, window_bounds = array<i64: 1, 32>}, {pipeline_mode = #tpu.pipeline_mode<synchronous>, transform_indices = @transform_3, window_bounds = array<i64: 1, 32>}, {pipeline_mode = #tpu.pipeline_mode<synchronous>, transform_indices = @transform_4, window_bounds = array<i64: 1, 32>}, {transform_indices = @transform_5, window_bounds = array<i64: 32, 384>}, {transform_indices = @transform_6, window_bounds = array<i64: 1, 384>}, {transform_indices = @transform_7, window_bounds = array<i64: 16, 384>}]} {
    %c0_i32 = arith.constant 0 : i32
    %0 = arith.cmpi eq, %arg1, %c0_i32 : i32
    %1 = arith.extui %0 : i1 to i32
    %c0_i32_0 = arith.constant 0 : i32
    %2 = arith.cmpi ne, %1, %c0_i32_0 : i32
    scf.if %2 {
      %c0_8 = arith.constant 0 : index
      %c0_9 = arith.constant 0 : index
      %11 = vector.load %arg2[%c0_8, %c0_9] : memref<16x32xbf16, #tpu.memory_space<vmem>>, vector<16x32xbf16>
      %c0_10 = arith.constant 0 : index
      %c0_11 = arith.constant 0 : index
      %12 = vector.load %arg3[%c0_10, %c0_11] : memref<32x32xbf16, #tpu.memory_space<vmem>>, vector<32x32xbf16>
      %cst_12 = arith.constant dense<0.000000e+00> : vector<16x32xf32>
      %13 = tpu.matmul %11, %12, %cst_12 {dimension_numbers = #tpu.dot_dimension_numbers<[1], [0], [0], [1], [0, 0, 1, 1], [], []>} : vector<16x32xbf16>, vector<32x32xbf16>, vector<16x32xf32> -> vector<16x32xf32>
      %c0_13 = arith.constant 0 : index
      %c0_14 = arith.constant 0 : index
      %14 = vector.load %arg4[%c0_13, %c0_14] : memref<1x32xf32, #tpu.memory_space<vmem>>, vector<1x32xf32>
      %15 = vector.broadcast %14 : vector<1x32xf32> to vector<16x32xf32>
      %16 = arith.addf %13, %15 : vector<16x32xf32>
      %cst_15 = arith.constant 5.000000e-01 : f32
      %17 = vector.broadcast %cst_15 : f32 to vector<16x32xf32>
      %18 = arith.mulf %17, %16 : vector<16x32xf32>
      %cst_16 = arith.constant 0.707106769 : f32
      %19 = vector.broadcast %cst_16 : f32 to vector<16x32xf32>
      %20 = arith.mulf %16, %19 : vector<16x32xf32>
      %21 = math.erf %20 : vector<16x32xf32>
      %cst_17 = arith.constant 1.000000e+00 : f32
      %22 = vector.broadcast %cst_17 : f32 to vector<16x32xf32>
      %23 = arith.addf %22, %21 : vector<16x32xf32>
      %24 = arith.mulf %18, %23 : vector<16x32xf32>
      %cst_18 = arith.constant dense<0.000000e+00> : vector<16xf32>
      %25 = vector.multi_reduction <add>, %24, %cst_18 [1] : vector<16x32xf32> to vector<16xf32>
      %26 = vector.shape_cast %25 : vector<16xf32> to vector<16x1xf32>
      %cst_19 = arith.constant 3.200000e+01 : f32
      %27 = vector.broadcast %cst_19 : f32 to vector<16x1xf32>
      %28 = arith.divf %26, %27 : vector<16x1xf32>
      %29 = vector.broadcast %28 : vector<16x1xf32> to vector<16x32xf32>
      %30 = arith.subf %24, %29 : vector<16x32xf32>
      %31 = arith.mulf %30, %30 : vector<16x32xf32>
      %cst_20 = arith.constant dense<0.000000e+00> : vector<16xf32>
      %32 = vector.multi_reduction <add>, %31, %cst_20 [1] : vector<16x32xf32> to vector<16xf32>
      %33 = vector.shape_cast %32 : vector<16xf32> to vector<16x1xf32>
      %cst_21 = arith.constant 3.200000e+01 : f32
      %34 = vector.broadcast %cst_21 : f32 to vector<16x1xf32>
      %35 = arith.divf %33, %34 : vector<16x1xf32>
      %36 = vector.broadcast %28 : vector<16x1xf32> to vector<16x32xf32>
      %37 = arith.subf %24, %36 : vector<16x32xf32>
      %cst_22 = arith.constant 9.99999996E-13 : f32
      %38 = vector.broadcast %cst_22 : f32 to vector<16x1xf32>
      %39 = arith.addf %35, %38 : vector<16x1xf32>
      %40 = math.rsqrt %39 : vector<16x1xf32>
      %41 = vector.broadcast %40 : vector<16x1xf32> to vector<16x32xf32>
      %42 = arith.mulf %37, %41 : vector<16x32xf32>
      %c0_23 = arith.constant 0 : index
      %c0_24 = arith.constant 0 : index
      %43 = vector.load %arg5[%c0_23, %c0_24] : memref<1x32xf32, #tpu.memory_space<vmem>>, vector<1x32xf32>
      %44 = vector.broadcast %43 : vector<1x32xf32> to vector<16x32xf32>
      %45 = arith.mulf %42, %44 : vector<16x32xf32>
      %c0_25 = arith.constant 0 : index
      %c0_26 = arith.constant 0 : index
      %46 = vector.load %arg6[%c0_25, %c0_26] : memref<1x32xf32, #tpu.memory_space<vmem>>, vector<1x32xf32>
      %47 = vector.broadcast %46 : vector<1x32xf32> to vector<16x32xf32>
      %48 = arith.addf %45, %47 : vector<16x32xf32>
      %49 = arith.truncf %48 : vector<16x32xf32> to vector<16x32xbf16>
      %c0_27 = arith.constant 0 : index
      %c0_28 = arith.constant 0 : index
      %50 = vector.load %arg10[%c0_27, %c0_28] : memref<16x32xbf16, #tpu.memory_space<vmem>>, vector<16x32xbf16>
      tpu.vector_store %arg10[%c0_27, %c0_28], %49 {strides = array<i32>} : memref<16x32xbf16, #tpu.memory_space<vmem>>, vector<16x32xbf16>,
    } else {
    }
    %c0 = arith.constant 0 : index
    %c0_1 = arith.constant 0 : index
    %3 = vector.load %arg10[%c0, %c0_1] : memref<16x32xbf16, #tpu.memory_space<vmem>>, vector<16x32xbf16>
    %c0_2 = arith.constant 0 : index
    %c0_3 = arith.constant 0 : index
    %4 = vector.load %arg7[%c0_2, %c0_3] : memref<32x384xbf16, #tpu.memory_space<vmem>>, vector<32x384xbf16>
    %cst = arith.constant dense<0.000000e+00> : vector<16x384xf32>
    %5 = tpu.matmul %3, %4, %cst {dimension_numbers = #tpu.dot_dimension_numbers<[1], [0], [0], [1], [0, 0, 1, 1], [], []>} : vector<16x32xbf16>, vector<32x384xbf16>, vector<16x384xf32> -> vector<16x384xf32>
    %c0_4 = arith.constant 0 : index
    %c0_5 = arith.constant 0 : index
    %6 = vector.load %arg8[%c0_4, %c0_5] : memref<1x384xf32, #tpu.memory_space<vmem>>, vector<1x384xf32>
    %7 = vector.broadcast %6 : vector<1x384xf32> to vector<16x384xf32>
    %8 = arith.addf %5, %7 : vector<16x384xf32>
    %9 = arith.truncf %8 : vector<16x384xf32> to vector<16x384xbf16>
    %c0_6 = arith.constant 0 : index
    %c0_7 = arith.constant 0 : index
    %10 = vector.load %arg9[%c0_6, %c0_7] : memref<16x384xbf16, #tpu.memory_space<vmem>>, vector<16x384xbf16>
    tpu.vector_store %arg9[%c0_6, %c0_7], %9 {strides = array<i32>} : memref<16x384xbf16, #tpu.memory_space<vmem>>, vector<16x384xbf16>,
    return
  }
  func.func @transform_0(%arg0: i32, %arg1: i32) -> (i32, i32) {
    %c0_i32 = arith.constant 0 : i32
    %c0_i32_0 = arith.constant 0 : i32
    return %arg0, %c0_i32 : i32, i32
  }
  func.func @transform_1(%arg0: i32, %arg1: i32) -> (i32, i32) {
    %c0_i32 = arith.constant 0 : i32
    %c0_i32_0 = arith.constant 0 : i32
    %c0_i32_1 = arith.constant 0 : i32
    return %c0_i32, %c0_i32_0 : i32, i32
  }
  func.func @transform_2(%arg0: i32, %arg1: i32) -> (i32, i32) {
    %c0_i32 = arith.constant 0 : i32
    %c0_i32_0 = arith.constant 0 : i32
    %c0_i32_1 = arith.constant 0 : i32
    return %c0_i32, %c0_i32_0 : i32, i32
  }
  func.func @transform_3(%arg0: i32, %arg1: i32) -> (i32, i32) {
    %c0_i32 = arith.constant 0 : i32
    %c0_i32_0 = arith.constant 0 : i32
    %c0_i32_1 = arith.constant 0 : i32
    return %c0_i32, %c0_i32_0 : i32, i32
  }
  func.func @transform_4(%arg0: i32, %arg1: i32) -> (i32, i32) {
    %c0_i32 = arith.constant 0 : i32
    %c0_i32_0 = arith.constant 0 : i32
    %c0_i32_1 = arith.constant 0 : i32
    return %c0_i32, %c0_i32_0 : i32, i32
  }
  func.func @transform_5(%arg0: i32, %arg1: i32) -> (i32, i32) {
    %c0_i32 = arith.constant 0 : i32
    %c0_i32_0 = arith.constant 0 : i32
    return %c0_i32, %arg1 : i32, i32
  }
  func.func @transform_6(%arg0: i32, %arg1: i32) -> (i32, i32) {
    %c0_i32 = arith.constant 0 : i32
    %c0_i32_0 = arith.constant 0 : i32
    return %c0_i32, %arg1 : i32, i32
  }
  func.func @transform_7(%arg0: i32, %arg1: i32) -> (i32, i32) {
    %c0_i32 = arith.constant 0 : i32
    return %arg0, %arg1 : i32, i32
  }
}

</mosaic_0001>

<llo_original>
// kernel: tpu_custom_call.1
$region0: #{tpu_custom_call.1}
  #allocation0 [shape = 'u32[]', space=smem, size = 0x4, offset = 0x4, fixed_abs, tag = 'smem constant byte address 0x4 - core index']
  #allocation1 [shape = 'u32[144,128]{1,0:T(1,128)}', space=vmem, size = 0x12000, scoped, tag = 'internal scratch']
  #allocation2 [shape = 'bf16[16,32]{1,0:T(16,128)(2,1)}', space=vmem, size = 0x1000, scoped, tag = 'scratch operand']
  %s0 = inlined_call_operand.hbm [shape: bf16[16,32], index: 0, kind: input, shape index: {}]
  %s1 = inlined_call_operand.hbm [shape: bf16[32,32], index: 1, kind: input, shape index: {}]
  %s2 = inlined_call_operand.vmem [shape: f32[1,32], index: 2, kind: input, shape index: {}]
  %s3 = inlined_call_operand.vmem [shape: f32[1,32], index: 3, kind: input, shape index: {}]
  %s4 = inlined_call_operand.vmem [shape: f32[1,32], index: 4, kind: input, shape index: {}]
  %s5 = inlined_call_operand.hbm [shape: bf16[32,384], index: 5, kind: input, shape index: {}]
  %s6 = inlined_call_operand.vmem [shape: f32[1,384], index: 6, kind: input, shape index: {}]
  %s7 = inlined_call_operand.hbm [shape: bf16[16,384], index: 7, kind: output, shape index: {}]
  %s8 = sld [smem:[#allocation0]]
  $region54: #{tpu_custom_call.1} parent=0
    _
  %s10 = ssub.s32 1, %s8
  %s11 = scalar_select 0, %s10, %s8
  $region1: #{tpu_custom_call.1} parent=0
    #allocation3 [shape = 'u8[4096]{0}', space=vmem, size = 0x1000, scoped, tag = 'input window, operand 0, single buffered']
    #allocation4 [shape = 's32[1]{0}', space=sflag, size = 0x4, scoped, tag = 'scoped memory for tpu_custom_call.1']
    #allocation5 [shape = 's32[1]{0}', space=sflag, size = 0x4, scoped, tag = 'scoped memory for tpu_custom_call.1']
    #allocation6 [shape = 'u8[8192]{0}', space=vmem, size = 0x2000, scoped, tag = 'input window, operand 1, single buffered']
    #allocation7 [shape = 's32[1]{0}', space=sflag, size = 0x4, scoped, tag = 'scoped memory for tpu_custom_call.1']
    #allocation8 [shape = 'u8[24576]{0}', space=vmem, size = 0x6000, scoped, tag = 'input window, operand 5, single buffered']
    #allocation9 [shape = 'u8[12288]{0}', space=vmem, size = 0x3000, scoped, tag = 'output window, operand 0, single buffered']
    %12 = vsyncpa [#allocation4], 0
    %13 = vsyncpa [#allocation7], 0
    %14 = vsyncpa [#allocation5], 0
    // Predicated region
    $region2: #{tpu_custom_call.1} parent=1 // pred_check
      _
    $region3: #{tpu_custom_call.1} parent=1 // pred_check_branch
      %16 = sbr.rel (0) target = $region5
    $region4: #{tpu_custom_call.1} parent=1 // pred_region
      %s18 = ssub.s32 128, 128
      %19 = vsyncadd [#allocation4], %s18
      %s20 = sshll.u32 [#allocation3], 4
      %s21 = int_to_ptr.vmem [resolvable:$true] %s20
      %26 = dma.hbm_to_vmem [thread:$0]  %s0, 128, %s21, [#allocation4], 64, 64, 4
    $region5: #{tpu_custom_call.1} parent=1 // pred_fallthru
      _
    // Predicated region
    $region6: #{tpu_custom_call.1} parent=1 // pred_check
      _
    $region7: #{tpu_custom_call.1} parent=1 // pred_check_branch
      %28 = sbr.rel (0) target = $region9
    $region8: #{tpu_custom_call.1} parent=1 // pred_region
      %s30 = ssub.s32 256, 256
      %31 = vsyncadd [#allocation7], %s30
      %s32 = sshll.u32 [#allocation6], 4
      %s33 = int_to_ptr.vmem [resolvable:$true] %s32
      %38 = dma.hbm_to_vmem [thread:$0]  %s1, 256, %s33, [#allocation7], 64, 64, 4
    $region9: #{tpu_custom_call.1} parent=1 // pred_fallthru
      _
    // Predicated region
    $region10: #{tpu_custom_call.1} parent=1 // pred_check
      _
    $region11: #{tpu_custom_call.1} parent=1 // pred_check_branch
      %40 = sbr.rel (0) target = $region13
    $region12: #{tpu_custom_call.1} parent=1 // pred_region
      _
    $region13: #{tpu_custom_call.1} parent=1 // pred_fallthru
      _
    // Predicated region
    $region14: #{tpu_custom_call.1} parent=1 // pred_check
      _
    $region15: #{tpu_custom_call.1} parent=1 // pred_check_branch
      %42 = sbr.rel (0) target = $region17
    $region16: #{tpu_custom_call.1} parent=1 // pred_region
      _
    $region17: #{tpu_custom_call.1} parent=1 // pred_fallthru
      _
    // Predicated region
    $region18: #{tpu_custom_call.1} parent=1 // pred_check
      _
    $region19: #{tpu_custom_call.1} parent=1 // pred_check_branch
      %44 = sbr.rel (0) target = $region21
    $region20: #{tpu_custom_call.1} parent=1 // pred_region
      _
    $region21: #{tpu_custom_call.1} parent=1 // pred_fallthru
      _
    // Predicated region
    $region22: #{tpu_custom_call.1} parent=1 // pred_check
      _
    $region23: #{tpu_custom_call.1} parent=1 // pred_check_branch
      %46 = sbr.rel (0) target = $region25
    $region24: #{tpu_custom_call.1} parent=1 // pred_region
      %s48 = ssub.s32 768, 768
      %49 = vsyncadd [#allocation7], %s48
      %s50 = sshll.u32 [#allocation8], 4
      %s51 = int_to_ptr.vmem [resolvable:$true] %s50
      %56 = dma.hbm_to_vmem [thread:$0]  %s5, 768, %s51, [#allocation7], 192, 192, 12
    $region25: #{tpu_custom_call.1} parent=1 // pred_fallthru
      _
    // Predicated region
    $region26: #{tpu_custom_call.1} parent=1 // pred_check
      _
    $region27: #{tpu_custom_call.1} parent=1 // pred_check_branch
      %58 = sbr.rel (0) target = $region29
    $region28: #{tpu_custom_call.1} parent=1 // pred_region
      _
    $region29: #{tpu_custom_call.1} parent=1 // pred_fallthru
      _
    // Predicated region
    $region30: #{tpu_custom_call.1} parent=1 // pred_check
      _
    $region31: #{tpu_custom_call.1} parent=1 // pred_check_branch
      %60 = sbr.rel (0) target = $region33
    $region32: #{tpu_custom_call.1} parent=1 // pred_region
      %61 = dma.done [#allocation4], 128
    $region33: #{tpu_custom_call.1} parent=1 // pred_fallthru
      _
    // Predicated region
    $region34: #{tpu_custom_call.1} parent=1 // pred_check
      _
    $region35: #{tpu_custom_call.1} parent=1 // pred_check_branch
      %63 = sbr.rel (0) target = $region37
    $region36: #{tpu_custom_call.1} parent=1 // pred_region
      %64 = dma.done [#allocation7], 256
    $region37: #{tpu_custom_call.1} parent=1 // pred_fallthru
      _
    // Predicated region
    $region38: #{tpu_custom_call.1} parent=1 // pred_check
      _
    $region39: #{tpu_custom_call.1} parent=1 // pred_check_branch
      %66 = sbr.rel (0) target = $region41
    $region40: #{tpu_custom_call.1} parent=1 // pred_region
      %67 = dma.done [#allocation7], 768
    $region41: #{tpu_custom_call.1} parent=1 // pred_fallthru
      _
    %p69 = scmp.eq.s32.totalorder 0, 0
    // Predicated region
    $region42: #{tpu_custom_call.1} parent=1 // pred_check
      %p70 = pneg %p69
    $region43: #{tpu_custom_call.1} parent=1 // pred_check_branch
      %72 = sbr.rel (%p70) target = $region45
    $region44: #{tpu_custom_call.1} parent=1 // pred_region
      %v73 = vld [vmem:[#allocation3] sm:$0xf]
      %v74 = vld [vmem:[#allocation3 + $0x4] sm:$0xf]
      %v75 = vld [vmem:[#allocation6] sm:$0xf]
      %v76 = vld [vmem:[#allocation6 + $0x4] sm:$0xf]
      %v77 = vld [vmem:[#allocation6 + $0x8] sm:$0xf]
      %v78 = vld [vmem:[#allocation6 + $0xc] sm:$0xf]
      %v79 = vld [vmem:[%s2] sm:$0x1]
      %v81 = vlaneseq
      %v82 = vshrl.u32 %v81, 7
      %v83 = vsub.s32 0, %v82
      %v84 = vrot.slane %v79, %v83
      %v88 = vunpack.c.l.b16 %v73
      %v89 = vunpack.c.l.b16 %v74
      %v90 = vpack.c.b16 %v89, %v88
      %v95 = vunpack.c.l.b16 %v75
      %v96 = vunpack.c.l.b16 %v76
      %v97 = vunpack.c.l.b16 %v77
      %v98 = vunpack.c.l.b16 %v78
      %v99 = vpack.c.b16 %v96, %v95
      %v100 = vpack.c.b16 %v98, %v97
      %vm103 = vcmask 261120
      %v105 = vsel %vm103, %v90, 0
      %107 = vmatprep.subr.bf16.mxu0 0
      %108 = vmatpush1.bf16.msra.mxu0 %v99
      %109 = vmatprep.subr.bf16.mxu0 0
      %110 = vmatpush1.bf16.msra.mxu0 %v100
      %111 = vmatprep.subr.bf16.mxu0 0
      %112 = vmatpush1.bf16.msra.mxu0 0
      %113 = vmatprep.subr.bf16.mxu0 0
      %114 = vmatpush1.bf16.msra.mxu0 0
      %115 = vmatprep.subr.bf16.mxu0 0
      %116 = vmatpush1.bf16.msra.mxu0 0
      %117 = vmatprep.subr.bf16.mxu0 0
      %118 = vmatpush1.bf16.msra.mxu0 0
      %119 = vmatprep.subr.bf16.mxu0 0
      %120 = vmatpush1.bf16.msra.mxu0 0
      %121 = vmatprep.subr.bf16.mxu0 0
      %122 = vmatpush1.bf16.msra.mxu0 0
      %123 = vmatprep.subr.bf16.mxu0 0
      %124 = vmatpush1.bf16.msra.mxu0 0
      %125 = vmatprep.subr.bf16.mxu0 0
      %126 = vmatpush1.bf16.msra.mxu0 0
      %127 = vmatprep.subr.bf16.mxu0 0
      %128 = vmatpush1.bf16.msra.mxu0 0
      %129 = vmatprep.subr.bf16.mxu0 0
      %130 = vmatpush1.bf16.msra.mxu0 0
      %131 = vmatprep.subr.bf16.mxu0 0
      %132 = vmatpush1.bf16.msra.mxu0 0
      %133 = vmatprep.subr.bf16.mxu0 0
      %134 = vmatpush1.bf16.msra.mxu0 0
      %135 = vmatprep.subr.bf16.mxu0 0
      %136 = vmatpush1.bf16.msra.mxu0 0
      %137 = vmatprep.subr.bf16.mxu0 0
      %138 = vmatpush1.bf16.msra.mxu0 0
      %139 = vmatprep.mubr.bf16.mxu0 0
      %140 = vmatmul.mubr.bf16.gmra.mrb[0].mxu0 %v105
      %v141 = vpop.f32.mrb[0].mxu0
      %v142 = vadd.f32 %v84, %v141
      %v143 = vpop.f32.mrb[0].mxu0
      %v144 = vpop.f32.mrb[0].mxu0
      %v145 = vadd.f32 %v84, %v144
      %v146 = vpop.f32.mrb[0].mxu0
      %147 = vdwg.mxu0
      %v148 = vmul.f32 %v142, 0.5
      %v149 = vmul.f32 %v145, 0.5
      %v150 = vmul.f32 %v142, 0.70710677
      %v151 = vmul.f32 %v145, 0.70710677
      %v152 = verf.f32.pop %v150
      %v153 = verf.f32.pop %v151
      %v154 = vadd.f32 %v152, 1.0
      %v155 = vadd.f32 %v153, 1.0
      %v156 = vmul.f32 %v148, %v154
      %v157 = vmul.f32 %v149, %v155
      %v158 = vsel %vm103, %v156, 0.0
      %159 = vadd.xlane.f32.xlu0 %v158
      %v160 = vpop.xlane.xlu0 %159
      %v161 = vsel %vm103, %v157, 0.0
      %162 = vadd.xlane.f32.xlu0 %v161
      %v163 = vpop.xlane.xlu0 %162
      %v164 = vrcp.pop 32.0
      %v165 = vmul.f32 %v160, %v164
      %v166 = vmul.f32 %v163, %v164
      %v167 = vsub.f32 %v156, %v165
      %v168 = vsub.f32 %v157, %v166
      %v169 = vmul.f32 %v167, %v167
      %v170 = vmul.f32 %v168, %v168
      %v171 = vsel %vm103, %v169, 0.0
      %172 = vadd.xlane.f32.xlu0 %v171
      %v173 = vpop.xlane.xlu0 %172
      %v174 = vsel %vm103, %v170, 0.0
      %175 = vadd.xlane.f32.xlu0 %v174
      %v176 = vpop.xlane.xlu0 %175
      %v177 = vmul.f32 %v173, %v164
      %v178 = vmul.f32 %v176, %v164
      %v179 = vadd.f32 %v177, 1e-12
      %v180 = vadd.f32 %v178, 1e-12
      %v181 = vrsqrt.pop %v179
      %v182 = vrsqrt.pop %v180
      %v183 = vmul.f32 %v167, %v181
      %v184 = vmul.f32 %v168, %v182
      %v185 = vld [vmem:[%s3] sm:$0x1]
      %v187 = vlaneseq
      %v188 = vshrl.u32 %v187, 7
      %v189 = vsub.s32 0, %v188
      %v190 = vrot.slane %v185, %v189
      %v192 = vmul.f32 %v183, %v190
      %v193 = vmul.f32 %v184, %v190
      %v194 = vld [vmem:[%s4] sm:$0x1]
      %v196 = vlaneseq
      %v197 = vshrl.u32 %v196, 7
      %v198 = vsub.s32 0, %v197
      %v199 = vrot.slane %v194, %v198
      %v201 = vadd.f32 %v192, %v199
      %v202 = vadd.f32 %v193, %v199
      %v203 = vpack.c.bf16 %v202, %v201
      %204 = vst.msk [vmem:[#allocation2] sm:$0xff] %vm103, %v203
    $region45: #{tpu_custom_call.1} parent=1 // pred_fallthru
      _
    %v205 = vld [vmem:[#allocation2] sm:$0xff]
    %v206 = vld [vmem:[#allocation8] sm:$0xff]
    %v207 = vld [vmem:[#allocation8 + $0x8] sm:$0xf]
    %v208 = vld [vmem:[#allocation8 + $0xc] sm:$0xff]
    %v209 = vld [vmem:[#allocation8 + $0x14] sm:$0xf]
    %v210 = vld [vmem:[#allocation8 + $0x18] sm:$0xff]
    %v211 = vld [vmem:[#allocation8 + $0x20] sm:$0xf]
    %v212 = vld [vmem:[#allocation8 + $0x24] sm:$0xff]
    %v213 = vld [vmem:[#allocation8 + $0x2c] sm:$0xf]
    %v214 = vld [vmem:[%s6] sm:$0x7]
    %v216 = vlaneseq
    %v217 = vshrl.u32 %v216, 7
    %v218 = vsub.s32 0, %v217
    %v219 = vrot.slane %v214, %v218
    %v220 = vlaneseq
    %v221 = vshrl.u32 %v220, 7
    %v222 = vsub.s32 1, %v221
    %v223 = vrot.slane %v214, %v222
    %v224 = vlaneseq
    %v225 = vshrl.u32 %v224, 7
    %v226 = vsub.s32 2, %v225
    %v227 = vrot.slane %v214, %v226
    %v239 = vunpack.c.l.b16 %v206
    %v240 = vunpack.c.h.b16 %v206
    %v241 = vunpack.c.l.b16 %v207
    %v242 = vunpack.c.l.b16 %v208
    %v243 = vunpack.c.h.b16 %v208
    %v244 = vunpack.c.l.b16 %v209
    %v245 = vunpack.c.l.b16 %v210
    %v246 = vunpack.c.h.b16 %v210
    %v247 = vunpack.c.l.b16 %v211
    %v248 = vunpack.c.l.b16 %v212
    %v249 = vunpack.c.h.b16 %v212
    %v250 = vunpack.c.l.b16 %v213
    %v251 = vpack.c.b16 %v242, %v239
    %v252 = vpack.c.b16 %v243, %v240
    %v253 = vpack.c.b16 %v244, %v241
    %v254 = vpack.c.b16 %v248, %v245
    %v255 = vpack.c.b16 %v249, %v246
    %v256 = vpack.c.b16 %v250, %v247
    %vm263 = vcmask 261120
    %v265 = vsel %vm263, %v205, 0
    %267 = vmatprep.subr.bf16.mxu0 %v252
    %268 = vmatpush1.bf16.msra.mxu0 %v251
    %269 = vmatprep.subr.bf16.mxu0 %v255
    %270 = vmatpush1.bf16.msra.mxu0 %v254
    %271 = vmatprep.subr.bf16.mxu0 0
    %272 = vmatpush1.bf16.msra.mxu0 0
    %273 = vmatprep.subr.bf16.mxu0 0
    %274 = vmatpush1.bf16.msra.mxu0 0
    %275 = vmatprep.subr.bf16.mxu0 0
    %276 = vmatpush1.bf16.msra.mxu0 0
    %277 = vmatprep.subr.bf16.mxu0 0
    %278 = vmatpush1.bf16.msra.mxu0 0
    %279 = vmatprep.subr.bf16.mxu0 0
    %280 = vmatpush1.bf16.msra.mxu0 0
    %281 = vmatprep.subr.bf16.mxu0 0
    %282 = vmatpush1.bf16.msra.mxu0 0
    %283 = vmatprep.subr.bf16.mxu0 0
    %284 = vmatpush1.bf16.msra.mxu0 0
    %285 = vmatprep.subr.bf16.mxu0 0
    %286 = vmatpush1.bf16.msra.mxu0 0
    %287 = vmatprep.subr.bf16.mxu0 0
    %288 = vmatpush1.bf16.msra.mxu0 0
    %289 = vmatprep.subr.bf16.mxu0 0
    %290 = vmatpush1.bf16.msra.mxu0 0
    %291 = vmatprep.subr.bf16.mxu0 0
    %292 = vmatpush1.bf16.msra.mxu0 0
    %293 = vmatprep.subr.bf16.mxu0 0
    %294 = vmatpush1.bf16.msra.mxu0 0
    %295 = vmatprep.subr.bf16.mxu0 0
    %296 = vmatpush1.bf16.msra.mxu0 0
    %297 = vmatprep.subr.bf16.mxu0 0
    %298 = vmatpush1.bf16.msra.mxu0 0
    %299 = vmatprep.mubr.bf16.mxu0 0
    %300 = vmatmul.mubr.bf16.gmra.mrb[0].mxu0 %v265
    %v301 = vpop.f32.mrb[0].mxu0
    %v302 = vadd.f32 %v219, %v301
    %v303 = vpop.f32.mrb[0].mxu0
    %v304 = vadd.f32 %v223, %v303
    %v305 = vpop.f32.mrb[0].mxu0
    %v306 = vadd.f32 %v219, %v305
    %v307 = vpop.f32.mrb[0].mxu0
    %v308 = vadd.f32 %v223, %v307
    %309 = vdwg.mxu0
    %310 = vmatprep.subr.bf16.mxu0 0
    %311 = vmatpush1.bf16.msra.mxu0 %v253
    %312 = vmatprep.subr.bf16.mxu0 0
    %313 = vmatpush1.bf16.msra.mxu0 %v256
    %314 = vmatprep.subr.bf16.mxu0 0
    %315 = vmatpush1.bf16.msra.mxu0 0
    %316 = vmatprep.subr.bf16.mxu0 0
    %317 = vmatpush1.bf16.msra.mxu0 0
    %318 = vmatprep.subr.bf16.mxu0 0
    %319 = vmatpush1.bf16.msra.mxu0 0
    %320 = vmatprep.subr.bf16.mxu0 0
    %321 = vmatpush1.bf16.msra.mxu0 0
    %322 = vmatprep.subr.bf16.mxu0 0
    %323 = vmatpush1.bf16.msra.mxu0 0
    %324 = vmatprep.subr.bf16.mxu0 0
    %325 = vmatpush1.bf16.msra.mxu0 0
    %326 = vmatprep.subr.bf16.mxu0 0
    %327 = vmatpush1.bf16.msra.mxu0 0
    %328 = vmatprep.subr.bf16.mxu0 0
    %329 = vmatpush1.bf16.msra.mxu0 0
    %330 = vmatprep.subr.bf16.mxu0 0
    %331 = vmatpush1.bf16.msra.mxu0 0
    %332 = vmatprep.subr.bf16.mxu0 0
    %333 = vmatpush1.bf16.msra.mxu0 0
    %334 = vmatprep.subr.bf16.mxu0 0
    %335 = vmatpush1.bf16.msra.mxu0 0
    %336 = vmatprep.subr.bf16.mxu0 0
    %337 = vmatpush1.bf16.msra.mxu0 0
    %338 = vmatprep.subr.bf16.mxu0 0
    %339 = vmatpush1.bf16.msra.mxu0 0
    %340 = vmatprep.subr.bf16.mxu0 0
    %341 = vmatpush1.bf16.msra.mxu0 0
    %342 = vmatprep.mubr.bf16.mxu0 0
    %343 = vmatmul.mubr.bf16.gmra.mrb[0].mxu0 %v265
    %v344 = vpop.f32.mrb[0].mxu0
    %v345 = vadd.f32 %v227, %v344
    %v346 = vpop.f32.mrb[0].mxu0
    %v347 = vpop.f32.mrb[0].mxu0
    %v348 = vadd.f32 %v227, %v347
    %v349 = vpop.f32.mrb[0].mxu0
    %350 = vdwg.mxu0
    %v351 = vpack.c.bf16 %v306, %v302
    %v352 = vpack.c.bf16 %v308, %v304
    %v353 = vpack.c.bf16 %v348, %v345
    %v357 = vunpack.c.l.b16 %v351
    %v358 = vunpack.c.l.b16 %v352
    %v359 = vunpack.c.l.b16 %v353
    %v360 = vunpack.c.h.b16 %v351
    %v361 = vunpack.c.h.b16 %v352
    %v362 = vunpack.c.h.b16 %v353
    %v363 = vpack.c.b16 %v358, %v357
    %v364 = vpack.c.b16 %v359, %v359
    %v365 = vpack.c.b16 %v361, %v360
    %v366 = vpack.c.b16 %v362, %v362
    %371 = vst [vmem:[#allocation9] sm:$0xff] %v363
    %372 = vst [vmem:[#allocation9 + $0x8] sm:$0xf] %v364
    %373 = vst [vmem:[#allocation9 + $0xc] sm:$0xff] %v365
    %374 = vst [vmem:[#allocation9 + $0x14] sm:$0xf] %v366
    // Predicated region
    $region46: #{tpu_custom_call.1} parent=1 // pred_check
      _
    $region47: #{tpu_custom_call.1} parent=1 // pred_check_branch
      %376 = sbr.rel (0) target = $region49
    $region48: #{tpu_custom_call.1} parent=1 // pred_region
      %s378 = ssub.s32 384, 384
      %379 = vsyncadd [#allocation5], %s378
      %s380 = sshll.u32 [#allocation9], 4
      %s381 = int_to_ptr.vmem [resolvable:$true] %s380
      %386 = dma.vmem_to_hbm [thread:$0]  %s381, 384, %s7, [#allocation5], 192, 192, 12
    $region49: #{tpu_custom_call.1} parent=1 // pred_fallthru
      _
    // Predicated region
    $region50: #{tpu_custom_call.1} parent=1 // pred_check
      _
    $region51: #{tpu_custom_call.1} parent=1 // pred_check_branch
      %388 = sbr.rel (0) target = $region53
    $region52: #{tpu_custom_call.1} parent=1 // pred_region
      %389 = dma.done [#allocation5], 384
    $region53: #{tpu_custom_call.1} parent=1 // pred_fallthru
      _
    %390 = vsyncpa [#allocation4], 1
    %391 = vsyncpa [#allocation7], 1
    %392 = vsyncpa [#allocation5], 1

</llo_original>
